<compile_context>
chip_gen: v5e
topology: v5e:2x2
jax: 0.10.0
libtpu: 0.0.40
codegen_flags: <defaults>
</compile_context>

<pallas_src>
import math

import jax
import jax.numpy as jnp
from jax.experimental import pallas as pl
from jax.experimental.pallas import tpu as pltpu

NEG_SLOPE = 0.01      # F.leaky_relu / nn.LeakyReLU default
BN_EPS = 1e-5         # nn.BatchNorm2d default


def _leaky(y):
    return jnp.where(y > 0, y, NEG_SLOPE * y)


# ----------------------------------------------------------------------------
# Fused kernels (everything stays (C, H*W) lane-dense inside the kernel)
# ----------------------------------------------------------------------------
def _make_conv_bottleneck_kernel(H, W, K, use_res):
    """conv1(1x1)+BN+leaky -> conv2(KxK)+BN+leaky -> optional +identity."""
    pad = (K - 1) // 2
    HW = H * W

    def kernel(x_ref, w1_ref, b1_ref, mask_ref, w2_ref, b2_ref, o_ref, slab_ref):
        cmid = w1_ref.shape[0]
        x = x_ref[0]                                             # (Cin, HW)

        # conv1: 1x1 conv (BN folded into w1/b1) + leaky
        h = jnp.dot(w1_ref[...], x, preferred_element_type=jnp.float32)
        h = _leaky(h + b1_ref[...])                              # (Cmid, HW)

        # im2col slab: K*K masked lane-rotations of h stacked on sublanes
        for dy in range(K):
            for dx in range(K):
                t = dy * K + dx
                s = (dy - pad) * W + (dx - pad)                  # flat tap shift
                shifted = h if s == 0 else pltpu.roll(h, shift=(-s) % HW, axis=1)
                slab_ref[t * cmid:(t + 1) * cmid, :] = shifted * mask_ref[t:t + 1, :]

        # conv2: one deep MXU matmul (contraction K*K*Cmid) + bias + leaky
        y = jnp.dot(w2_ref[...], slab_ref[...], preferred_element_type=jnp.float32)
        y = _leaky(y + b2_ref[...])                              # (Cout, HW)
        if use_res:
            y = y + x.astype(jnp.float32)
        o_ref[0] = y.astype(o_ref.dtype)

    return kernel


def _make_dw_bottleneck_kernel(H, W, K, use_res):
    """conv1(1x1) -> DPModule(depthwise KxK + pointwise 1x1) -> optional +identity."""
    pad = (K - 1) // 2
    HW = H * W

    def kernel(x_ref, w1_ref, b1_ref, mask_ref, wdw_ref, bdw_ref,
               wpw_ref, bpw_ref, o_ref):
        cmid = w1_ref.shape[0]
        x = x_ref[0]                                             # (Cin, HW)

        # conv1: 1x1 conv (BN folded) + leaky
        h = jnp.dot(w1_ref[...], x, preferred_element_type=jnp.float32)
        h = _leaky(h + b1_ref[...])                              # (Cmid, HW)

        # depthwise KxK conv (BN folded): lane-dense per-tap scale + accumulate
        acc = jnp.zeros((cmid, HW), jnp.float32)
        for dy in range(K):
            for dx in range(K):
                t = dy * K + dx
                s = (dy - pad) * W + (dx - pad)
                shifted = h if s == 0 else pltpu.roll(h, shift=(-s) % HW, axis=1)
                acc = acc + (shifted * mask_ref[t:t + 1, :]) * wdw_ref[t]
        d = _leaky(acc + bdw_ref[...])                           # (Cmid, HW)

        # pointwise 1x1 conv (BN folded) + leaky
        y = jnp.dot(wpw_ref[...], d, preferred_element_type=jnp.float32)
        y = _leaky(y + bpw_ref[...])                             # (Cout, HW)
        if use_res:
            y = y + x.astype(jnp.float32)
        o_ref[0] = y.astype(o_ref.dtype)

    return kernel


# ----------------------------------------------------------------------------
# pallas_call wrappers
# ----------------------------------------------------------------------------
def _call_fused_conv(x_flat, masks, f, H, W, K, use_res):
    N, Cin, HW = x_flat.shape
    Cmid = f["w1"].shape[0]
    Cout = f["w2"].shape[0]
    zero2 = lambda n: (0, 0)
    kernel = _make_conv_bottleneck_kernel(H, W, K, use_res)
    return pl.pallas_call(
        kernel,
        out_shape=jax.ShapeDtypeStruct((N, Cout, HW), x_flat.dtype),
        grid=(N,),
        in_specs=[
            pl.BlockSpec((1, Cin, HW), lambda n: (n, 0, 0)),
            pl.BlockSpec((Cmid, Cin), zero2),
            pl.BlockSpec((Cmid, 1), zero2),
            pl.BlockSpec((K * K, HW), zero2),
            pl.BlockSpec((Cout, K * K * Cmid), zero2),
            pl.BlockSpec((Cout, 1), zero2),
        ],
        out_specs=pl.BlockSpec((1, Cout, HW), lambda n: (n, 0, 0)),
        scratch_shapes=[pltpu.VMEM((K * K * Cmid, HW), jnp.float32)],
        compiler_params=pltpu.CompilerParams(dimension_semantics=("parallel",)),
    )(x_flat, f["w1"], f["b1"], masks, f["w2"], f["b2"])


def _call_fused_dw(x_flat, masks, f, H, W, K, use_res):
    N, Cin, HW = x_flat.shape
    Cmid = f["w1"].shape[0]
    Cout = f["wpw"].shape[0]
    zero2 = lambda n: (0, 0)
    zero3 = lambda n: (0, 0, 0)
    kernel = _make_dw_bottleneck_kernel(H, W, K, use_res)
    return pl.pallas_call(
        kernel,
        out_shape=jax.ShapeDtypeStruct((N, Cout, HW), x_flat.dtype),
        grid=(N,),
        in_specs=[
            pl.BlockSpec((1, Cin, HW), lambda n: (n, 0, 0)),
            pl.BlockSpec((Cmid, Cin), zero2),
            pl.BlockSpec((Cmid, 1), zero2),
            pl.BlockSpec((K * K, HW), zero2),
            pl.BlockSpec((K * K, Cmid, 1), zero3),
            pl.BlockSpec((Cmid, 1), zero2),
            pl.BlockSpec((Cout, Cmid), zero2),
            pl.BlockSpec((Cout, 1), zero2),
        ],
        out_specs=pl.BlockSpec((1, Cout, HW), lambda n: (n, 0, 0)),
        compiler_params=pltpu.CompilerParams(dimension_semantics=("parallel",)),
    )(x_flat, f["w1"], f["b1"], masks, f["wdw"], f["bdw"], f["wpw"], f["bpw"])


# ----------------------------------------------------------------------------
# Parameters: init (PyTorch layout), BN fold, tap validity masks
# ----------------------------------------------------------------------------
def _kaiming_uniform(key, shape, fan_in):
    bound = math.sqrt(6.0 / fan_in)   # kaiming_uniform_: gain sqrt(2) * sqrt(3/fan_in)
    return jax.random.uniform(key, shape, jnp.float32, -bound, bound)


def _rand_bn(key, c):
    k1, k2, k3, k4 = jax.random.split(key, 4)
    return {
        "gamma": jax.random.uniform(k1, (c,), jnp.float32, 0.5, 1.5),
        "beta": 0.1 * jax.random.normal(k2, (c,), jnp.float32),
        "mean": 0.1 * jax.random.normal(k3, (c,), jnp.float32),
        "var": jax.random.uniform(k4, (c,), jnp.float32, 0.5, 1.5),
    }


def _fold_bn(bn):
    scale = bn["gamma"] / jnp.sqrt(bn["var"] + BN_EPS)
    bias = bn["beta"] - bn["mean"] * scale
    return scale, bias


def darknet_bottleneck_init(key, in_ch, out_ch, kernel_size=3, expansion=0.5,
                            use_depthwise=False):
    hidden = int(out_ch * expansion)
    ks = jax.random.split(key, 6)
    p = {"in_ch": in_ch, "out_ch": out_ch, "hidden": hidden, "K": kernel_size,
         "use_depthwise": use_depthwise}
    # conv1: ConvBNLayer 1x1, PyTorch weight (hidden, in_ch, 1, 1)
    p["conv1_w"] = _kaiming_uniform(ks[0], (hidden, in_ch, 1, 1), fan_in=in_ch)
    p["bn1"] = _rand_bn(ks[1], hidden)
    if use_depthwise:
        # DPModule: depthwise KxK (groups=out_ch => hidden == out_ch) + pointwise 1x1
        assert hidden == out_ch, "nn.Conv2d depthwise groups constraint"
        p["dw_w"] = _kaiming_uniform(ks[2], (out_ch, 1, kernel_size, kernel_size),
                                     fan_in=kernel_size * kernel_size)
        p["bn_dw"] = _rand_bn(ks[3], out_ch)
        p["pw_w"] = _kaiming_uniform(ks[4], (out_ch, out_ch, 1, 1), fan_in=out_ch)
        p["bn_pw"] = _rand_bn(ks[5], out_ch)
    else:
        p["conv2_w"] = _kaiming_uniform(
            ks[2], (out_ch, hidden, kernel_size, kernel_size),
            fan_in=hidden * kernel_size * kernel_size)
        p["bn2"] = _rand_bn(ks[3], out_ch)
    return p


def _fold_params(p):
    """Fold inference-mode BN into conv weights; lay out for the fused kernel."""
    K, Cin, Cout, Cmid = p["K"], p["in_ch"], p["out_ch"], p["hidden"]
    f = {}
    s1, b1 = _fold_bn(p["bn1"])
    w1 = p["conv1_w"].reshape(Cmid, Cin)
    f["w1"] = (s1[:, None] * w1).astype(jnp.float32)                 # (Cmid, Cin)
    f["b1"] = b1.reshape(Cmid, 1).astype(jnp.float32)
    if p["use_depthwise"]:
        sd, bd = _fold_bn(p["bn_dw"])
        wdw = sd[:, None, None] * p["dw_w"][:, 0]                    # (C, K, K)
        # row order t*C + c with t = dy*K + dx  ->  (K*K, C, 1)
        f["wdw"] = jnp.transpose(wdw, (1, 2, 0)).reshape(K * K, Cmid, 1).astype(jnp.float32)
        f["bdw"] = bd.reshape(Cmid, 1).astype(jnp.float32)
        sp, bp = _fold_bn(p["bn_pw"])
        wpw = p["pw_w"].reshape(Cout, Cmid)
        f["wpw"] = (sp[:, None] * wpw).astype(jnp.float32)           # (Cout, Cmid)
        f["bpw"] = bp.reshape(Cout, 1).astype(jnp.float32)
    else:
        s2, b2 = _fold_bn(p["bn2"])
        w2 = s2[:, None, None, None] * p["conv2_w"]                  # (Cout, Cmid, K, K)
        # column order t*Cmid + c, t = dy*K + dx  ->  (Cout, K*K*Cmid)
        f["w2"] = jnp.transpose(w2, (0, 2, 3, 1)).reshape(Cout, K * K * Cmid).astype(jnp.float32)
        f["b2"] = b2.reshape(Cout, 1).astype(jnp.float32)
    return f


def _conv_masks(H, W, K):
    """(K*K, H*W) validity masks implementing "same" zero padding for each tap."""
    pad = (K - 1) // 2
    yy, xx = jnp.meshgrid(jnp.arange(H), jnp.arange(W), indexing="ij")
    yy = yy.reshape(-1)
    xx = xx.reshape(-1)
    rows = []
    for dy in range(K):
        for dx in range(K):
            oy, ox = dy - pad, dx - pad
            valid = ((yy + oy >= 0) & (yy + oy < H) &
                     (xx + ox >= 0) & (xx + ox < W))
            rows.append(valid.astype(jnp.float32))
    return jnp.stack(rows, axis=0)


# ----------------------------------------------------------------------------
# Forward (single fused pallas_call; only free reshapes in the wrapper)
# ----------------------------------------------------------------------------
def darknet_bottleneck_forward(params, x_nchw, add_identity=True):
    N, Cin, H, W = x_nchw.shape
    K = params["K"]
    Cout = params["out_ch"]
    use_res = add_identity and (Cin == Cout)

    x_flat = x_nchw.reshape(N, Cin, H * W)        # metadata-only reshape
    masks = _conv_masks(H, W, K)
    f = _fold_params(params)
    if params["use_depthwise"]:
        out = _call_fused_dw(x_flat, masks, f, H, W, K, use_res)
    else:
        out = _call_fused_conv(x_flat, masks, f, H, W, K, use_res)
    return out.reshape(N, Cout, H, W)


# ----------------------------------------------------------------------------
# Pure-JAX reference (lax.conv, NCHW) to verify the fused kernel
# ----------------------------------------------------------------------------
def ref_forward(params, x, add_identity=True):
    K = params["K"]
    pad = (K - 1) // 2
    dn = ("NCHW", "OIHW", "NCHW")

    def bn(y, bnp):
        s = bnp["gamma"] / jnp.sqrt(bnp["var"] + BN_EPS)
        b = bnp["beta"] - bnp["mean"] * s
        return y * s[None, :, None, None] + b[None, :, None, None]

    def conv(y, w, p, groups=1):
        return jax.lax.conv_general_dilated(
            y, w, (1, 1), [(p, p), (p, p)],
            dimension_numbers=dn, feature_group_count=groups)

    out = _leaky(bn(conv(x, params["conv1_w"], 0), params["bn1"]))
    if params["use_depthwise"]:
        C = params["out_ch"]
        out = _leaky(bn(conv(out, params["dw_w"], pad, groups=C), params["bn_dw"]))
        out = _leaky(bn(conv(out, params["pw_w"], 0), params["bn_pw"]))
    else:
        out = _leaky(bn(conv(out, params["conv2_w"], pad), params["bn2"]))
    if add_identity and x.shape[1] == out.shape[1]:
        out = out + x
    return out


if __name__ == "__main__":
    key = jax.random.PRNGKey(0)
    kx, kA, kB = jax.random.split(key, 3)
    N, C, H, W = 2, 8, 16, 16
    x = jax.random.normal(kx, (N, C, H, W), jnp.float32)

    # Config A: standard DarknetBottleneck(8, 8): 1x1 -> 3x3 ConvBNLayer, +identity
    pA = darknet_bottleneck_init(kA, C, C, kernel_size=3, expansion=0.5,
                                 use_depthwise=False)
    outA = darknet_bottleneck_forward(pA, x, add_identity=True)
    jax.block_until_ready(outA)
    refA = ref_forward(pA, x, add_identity=True)
    assert outA.shape == (N, C, H, W)
    errA = float(jnp.max(jnp.abs(outA - refA)))
    assert jnp.allclose(outA, refA, atol=1e-4, rtol=1e-4), f"conv path mismatch {errA}"

    # Config B: use_depthwise=True -> DPModule path (expansion=1.0 so the
    # depthwise groups constraint hidden == out_ch holds), +identity
    pB = darknet_bottleneck_init(kB, C, C, kernel_size=3, expansion=1.0,
                                 use_depthwise=True)
    outB = darknet_bottleneck_forward(pB, x, add_identity=True)
    jax.block_until_ready(outB)
    refB = ref_forward(pB, x, add_identity=True)
    assert outB.shape == (N, C, H, W)
    errB = float(jnp.max(jnp.abs(outB - refB)))
    assert jnp.allclose(outB, refB, atol=1e-4, rtol=1e-4), f"DPModule path mismatch {errB}"

    print("KERNEL_OK")
</pallas_src>

<mosaic_0001>
module attributes {stable_mosaic.version = 11 : i64} {
  func.func @kernel(%arg0: i32, %arg1: memref<1x8x256xf32, #tpu.memory_space<vmem>>, %arg2: memref<4x8xf32, #tpu.memory_space<vmem>>, %arg3: memref<4x1xf32, #tpu.memory_space<vmem>>, %arg4: memref<9x256xf32, #tpu.memory_space<vmem>>, %arg5: memref<8x36xf32, #tpu.memory_space<vmem>>, %arg6: memref<8x1xf32, #tpu.memory_space<vmem>>, %arg7: memref<1x8x256xf32, #tpu.memory_space<vmem>>, %arg8: memref<36x256xf32, #tpu.memory_space<vmem>>) attributes {dimension_semantics = [#tpu.dimension_semantics<parallel>], iteration_bounds = array<i64: 2>, scalar_prefetch = 0 : i64, scratch_operands = 1 : i64, tpu.core_type = #tpu.core_type<tc>, window_params = [{transform_indices = @transform_0, window_bounds = array<i64: 1, 8, 256>}, {pipeline_mode = #tpu.pipeline_mode<synchronous>, transform_indices = @transform_1, window_bounds = array<i64: 4, 8>}, {pipeline_mode = #tpu.pipeline_mode<synchronous>, transform_indices = @transform_2, window_bounds = array<i64: 4, 1>}, {pipeline_mode = #tpu.pipeline_mode<synchronous>, transform_indices = @transform_3, window_bounds = array<i64: 9, 256>}, {pipeline_mode = #tpu.pipeline_mode<synchronous>, transform_indices = @transform_4, window_bounds = array<i64: 8, 36>}, {pipeline_mode = #tpu.pipeline_mode<synchronous>, transform_indices = @transform_5, window_bounds = array<i64: 8, 1>}, {transform_indices = @transform_6, window_bounds = array<i64: 1, 8, 256>}]} {
    %c0 = arith.constant 0 : index
    %c0_0 = arith.constant 0 : index
    %c0_1 = arith.constant 0 : index
    %0 = vector.load %arg1[%c0, %c0_0, %c0_1] : memref<1x8x256xf32, #tpu.memory_space<vmem>>, vector<1x8x256xf32>
    %1 = vector.shape_cast %0 : vector<1x8x256xf32> to vector<8x256xf32>
    %c0_2 = arith.constant 0 : index
    %c0_3 = arith.constant 0 : index
    %2 = vector.load %arg2[%c0_2, %c0_3] : memref<4x8xf32, #tpu.memory_space<vmem>>, vector<4x8xf32>
    %cst = arith.constant dense<0.000000e+00> : vector<4x256xf32>
    %3 = tpu.matmul %2, %1, %cst {dimension_numbers = #tpu.dot_dimension_numbers<[1], [0], [0], [1], [0, 0, 1, 1], [], []>} : vector<4x8xf32>, vector<8x256xf32>, vector<4x256xf32> -> vector<4x256xf32>
    %c0_4 = arith.constant 0 : index
    %c0_5 = arith.constant 0 : index
    %4 = vector.load %arg3[%c0_4, %c0_5] : memref<4x1xf32, #tpu.memory_space<vmem>>, vector<4x1xf32>
    %5 = vector.broadcast %4 : vector<4x1xf32> to vector<4x256xf32>
    %6 = arith.addf %3, %5 : vector<4x256xf32>
    %cst_6 = arith.constant 0.000000e+00 : f32
    %7 = vector.broadcast %cst_6 : f32 to vector<4x256xf32>
    %8 = arith.cmpf ogt, %6, %7 : vector<4x256xf32>
    %cst_7 = arith.constant 0.00999999977 : f32
    %9 = vector.broadcast %cst_7 : f32 to vector<4x256xf32>
    %10 = arith.mulf %9, %6 : vector<4x256xf32>
    %11 = arith.select %8, %6, %10 : vector<4x256xi1>, vector<4x256xf32>
    %c17_i32 = arith.constant 17 : i32
    %12 = tpu.dynamic_rotate %11 by %c17_i32 dim 1 : vector<4x256xf32>, i32 -> vector<4x256xf32>
    %c0_8 = arith.constant 0 : index
    %c0_9 = arith.constant 0 : index
    %13 = vector.load %arg4[%c0_8, %c0_9] : memref<9x256xf32, #tpu.memory_space<vmem>>, vector<1x256xf32>
    %14 = vector.broadcast %13 : vector<1x256xf32> to vector<4x256xf32>
    %15 = arith.mulf %12, %14 : vector<4x256xf32>
    %c0_10 = arith.constant 0 : index
    %c0_11 = arith.constant 0 : index
    %16 = vector.load %arg8[%c0_10, %c0_11] : memref<36x256xf32, #tpu.memory_space<vmem>>, vector<4x256xf32>
    tpu.vector_store %arg8[%c0_10, %c0_11], %15 {strides = array<i32>} : memref<36x256xf32, #tpu.memory_space<vmem>>, vector<4x256xf32>,
    %c16_i32 = arith.constant 16 : i32
    %17 = tpu.dynamic_rotate %11 by %c16_i32 dim 1 : vector<4x256xf32>, i32 -> vector<4x256xf32>
    %c1 = arith.constant 1 : index
    %c0_12 = arith.constant 0 : index
    %18 = vector.load %arg4[%c1, %c0_12] : memref<9x256xf32, #tpu.memory_space<vmem>>, vector<1x256xf32>
    %19 = vector.broadcast %18 : vector<1x256xf32> to vector<4x256xf32>
    %20 = arith.mulf %17, %19 : vector<4x256xf32>
    %c4 = arith.constant 4 : index
    %c0_13 = arith.constant 0 : index
    %21 = vector.load %arg8[%c4, %c0_13] : memref<36x256xf32, #tpu.memory_space<vmem>>, vector<4x256xf32>
    tpu.vector_store %arg8[%c4, %c0_13], %20 {strides = array<i32>} : memref<36x256xf32, #tpu.memory_space<vmem>>, vector<4x256xf32>,
    %c15_i32 = arith.constant 15 : i32
    %22 = tpu.dynamic_rotate %11 by %c15_i32 dim 1 : vector<4x256xf32>, i32 -> vector<4x256xf32>
    %c2 = arith.constant 2 : index
    %c0_14 = arith.constant 0 : index
    %23 = vector.load %arg4[%c2, %c0_14] : memref<9x256xf32, #tpu.memory_space<vmem>>, vector<1x256xf32>
    %24 = vector.broadcast %23 : vector<1x256xf32> to vector<4x256xf32>
    %25 = arith.mulf %22, %24 : vector<4x256xf32>
    %c8 = arith.constant 8 : index
    %c0_15 = arith.constant 0 : index
    %26 = vector.load %arg8[%c8, %c0_15] : memref<36x256xf32, #tpu.memory_space<vmem>>, vector<4x256xf32>
    tpu.vector_store %arg8[%c8, %c0_15], %25 {strides = array<i32>} : memref<36x256xf32, #tpu.memory_space<vmem>>, vector<4x256xf32>,
    %c1_i32 = arith.constant 1 : i32
    %27 = tpu.dynamic_rotate %11 by %c1_i32 dim 1 : vector<4x256xf32>, i32 -> vector<4x256xf32>
    %c3 = arith.constant 3 : index
    %c0_16 = arith.constant 0 : index
    %28 = vector.load %arg4[%c3, %c0_16] : memref<9x256xf32, #tpu.memory_space<vmem>>, vector<1x256xf32>
    %29 = vector.broadcast %28 : vector<1x256xf32> to vector<4x256xf32>
    %30 = arith.mulf %27, %29 : vector<4x256xf32>
    %c12 = arith.constant 12 : index
    %c0_17 = arith.constant 0 : index
    %31 = vector.load %arg8[%c12, %c0_17] : memref<36x256xf32, #tpu.memory_space<vmem>>, vector<4x256xf32>
    tpu.vector_store %arg8[%c12, %c0_17], %30 {strides = array<i32>} : memref<36x256xf32, #tpu.memory_space<vmem>>, vector<4x256xf32>,
    %c4_18 = arith.constant 4 : index
    %c0_19 = arith.constant 0 : index
    %32 = vector.load %arg4[%c4_18, %c0_19] : memref<9x256xf32, #tpu.memory_space<vmem>>, vector<1x256xf32>
    %33 = vector.broadcast %32 : vector<1x256xf32> to vector<4x256xf32>
    %34 = arith.mulf %11, %33 : vector<4x256xf32>
    %c16 = arith.constant 16 : index
    %c0_20 = arith.constant 0 : index
    %35 = vector.load %arg8[%c16, %c0_20] : memref<36x256xf32, #tpu.memory_space<vmem>>, vector<4x256xf32>
    tpu.vector_store %arg8[%c16, %c0_20], %34 {strides = array<i32>} : memref<36x256xf32, #tpu.memory_space<vmem>>, vector<4x256xf32>,
    %c255_i32 = arith.constant 255 : i32
    %36 = tpu.dynamic_rotate %11 by %c255_i32 dim 1 : vector<4x256xf32>, i32 -> vector<4x256xf32>
    %c5 = arith.constant 5 : index
    %c0_21 = arith.constant 0 : index
    %37 = vector.load %arg4[%c5, %c0_21] : memref<9x256xf32, #tpu.memory_space<vmem>>, vector<1x256xf32>
    %38 = vector.broadcast %37 : vector<1x256xf32> to vector<4x256xf32>
    %39 = arith.mulf %36, %38 : vector<4x256xf32>
    %c20 = arith.constant 20 : index
    %c0_22 = arith.constant 0 : index
    %40 = vector.load %arg8[%c20, %c0_22] : memref<36x256xf32, #tpu.memory_space<vmem>>, vector<4x256xf32>
    tpu.vector_store %arg8[%c20, %c0_22], %39 {strides = array<i32>} : memref<36x256xf32, #tpu.memory_space<vmem>>, vector<4x256xf32>,
    %c241_i32 = arith.constant 241 : i32
    %41 = tpu.dynamic_rotate %11 by %c241_i32 dim 1 : vector<4x256xf32>, i32 -> vector<4x256xf32>
    %c6 = arith.constant 6 : index
    %c0_23 = arith.constant 0 : index
    %42 = vector.load %arg4[%c6, %c0_23] : memref<9x256xf32, #tpu.memory_space<vmem>>, vector<1x256xf32>
    %43 = vector.broadcast %42 : vector<1x256xf32> to vector<4x256xf32>
    %44 = arith.mulf %41, %43 : vector<4x256xf32>
    %c24 = arith.constant 24 : index
    %c0_24 = arith.constant 0 : index
    %45 = vector.load %arg8[%c24, %c0_24] : memref<36x256xf32, #tpu.memory_space<vmem>>, vector<4x256xf32>
    tpu.vector_store %arg8[%c24, %c0_24], %44 {strides = array<i32>} : memref<36x256xf32, #tpu.memory_space<vmem>>, vector<4x256xf32>,
    %c240_i32 = arith.constant 240 : i32
    %46 = tpu.dynamic_rotate %11 by %c240_i32 dim 1 : vector<4x256xf32>, i32 -> vector<4x256xf32>
    %c7 = arith.constant 7 : index
    %c0_25 = arith.constant 0 : index
    %47 = vector.load %arg4[%c7, %c0_25] : memref<9x256xf32, #tpu.memory_space<vmem>>, vector<1x256xf32>
    %48 = vector.broadcast %47 : vector<1x256xf32> to vector<4x256xf32>
    %49 = arith.mulf %46, %48 : vector<4x256xf32>
    %c28 = arith.constant 28 : index
    %c0_26 = arith.constant 0 : index
    %50 = vector.load %arg8[%c28, %c0_26] : memref<36x256xf32, #tpu.memory_space<vmem>>, vector<4x256xf32>
    tpu.vector_store %arg8[%c28, %c0_26], %49 {strides = array<i32>} : memref<36x256xf32, #tpu.memory_space<vmem>>, vector<4x256xf32>,
    %c239_i32 = arith.constant 239 : i32
    %51 = tpu.dynamic_rotate %11 by %c239_i32 dim 1 : vector<4x256xf32>, i32 -> vector<4x256xf32>
    %c8_27 = arith.constant 8 : index
    %c0_28 = arith.constant 0 : index
    %52 = vector.load %arg4[%c8_27, %c0_28] : memref<9x256xf32, #tpu.memory_space<vmem>>, vector<1x256xf32>
    %53 = vector.broadcast %52 : vector<1x256xf32> to vector<4x256xf32>
    %54 = arith.mulf %51, %53 : vector<4x256xf32>
    %c32 = arith.constant 32 : index
    %c0_29 = arith.constant 0 : index
    %55 = vector.load %arg8[%c32, %c0_29] : memref<36x256xf32, #tpu.memory_space<vmem>>, vector<4x256xf32>
    tpu.vector_store %arg8[%c32, %c0_29], %54 {strides = array<i32>} : memref<36x256xf32, #tpu.memory_space<vmem>>, vector<4x256xf32>,
    %c0_30 = arith.constant 0 : index
    %c0_31 = arith.constant 0 : index
    %56 = vector.load %arg5[%c0_30, %c0_31] : memref<8x36xf32, #tpu.memory_space<vmem>>, vector<8x36xf32>
    %c0_32 = arith.constant 0 : index
    %c0_33 = arith.constant 0 : index
    %57 = vector.load %arg8[%c0_32, %c0_33] : memref<36x256xf32, #tpu.memory_space<vmem>>, vector<36x256xf32>
    %cst_34 = arith.constant dense<0.000000e+00> : vector<8x256xf32>
    %58 = tpu.matmul %56, %57, %cst_34 {dimension_numbers = #tpu.dot_dimension_numbers<[1], [0], [0], [1], [0, 0, 1, 1], [], []>} : vector<8x36xf32>, vector<36x256xf32>, vector<8x256xf32> -> vector<8x256xf32>
    %c0_35 = arith.constant 0 : index
    %c0_36 = arith.constant 0 : index
    %59 = vector.load %arg6[%c0_35, %c0_36] : memref<8x1xf32, #tpu.memory_space<vmem>>, vector<8x1xf32>
    %60 = vector.broadcast %59 : vector<8x1xf32> to vector<8x256xf32>
    %61 = arith.addf %58, %60 : vector<8x256xf32>
    %cst_37 = arith.constant 0.000000e+00 : f32
    %62 = vector.broadcast %cst_37 : f32 to vector<8x256xf32>
    %63 = arith.cmpf ogt, %61, %62 : vector<8x256xf32>
    %cst_38 = arith.constant 0.00999999977 : f32
    %64 = vector.broadcast %cst_38 : f32 to vector<8x256xf32>
    %65 = arith.mulf %64, %61 : vector<8x256xf32>
    %66 = arith.select %63, %61, %65 : vector<8x256xi1>, vector<8x256xf32>
    %67 = arith.addf %66, %1 : vector<8x256xf32>
    %c0_39 = arith.constant 0 : index
    %c0_40 = arith.constant 0 : index
    %c0_41 = arith.constant 0 : index
    %68 = vector.load %arg7[%c0_39, %c0_40, %c0_41] : memref<1x8x256xf32, #tpu.memory_space<vmem>>, vector<1x8x256xf32>
    %69 = vector.shape_cast %68 : vector<1x8x256xf32> to vector<8x256xf32>
    %70 = vector.shape_cast %67 : vector<8x256xf32> to vector<1x8x256xf32>
    tpu.vector_store %arg7[%c0_39, %c0_40, %c0_41], %70 {strides = array<i32>} : memref<1x8x256xf32, #tpu.memory_space<vmem>>, vector<1x8x256xf32>,
    return
  }
  func.func @transform_0(%arg0: i32) -> (i32, i32, i32) {
    %c0_i32 = arith.constant 0 : i32
    %c0_i32_0 = arith.constant 0 : i32
    %c0_i32_1 = arith.constant 0 : i32
    return %arg0, %c0_i32, %c0_i32_0 : i32, i32, i32
  }
  func.func @transform_1(%arg0: i32) -> (i32, i32) {
    %c0_i32 = arith.constant 0 : i32
    %c0_i32_0 = arith.constant 0 : i32
    %c0_i32_1 = arith.constant 0 : i32
    return %c0_i32, %c0_i32_0 : i32, i32
  }
  func.func @transform_2(%arg0: i32) -> (i32, i32) {
    %c0_i32 = arith.constant 0 : i32
    %c0_i32_0 = arith.constant 0 : i32
    %c0_i32_1 = arith.constant 0 : i32
    return %c0_i32, %c0_i32_0 : i32, i32
  }
  func.func @transform_3(%arg0: i32) -> (i32, i32) {
    %c0_i32 = arith.constant 0 : i32
    %c0_i32_0 = arith.constant 0 : i32
    %c0_i32_1 = arith.constant 0 : i32
    return %c0_i32, %c0_i32_0 : i32, i32
  }
  func.func @transform_4(%arg0: i32) -> (i32, i32) {
    %c0_i32 = arith.constant 0 : i32
    %c0_i32_0 = arith.constant 0 : i32
    %c0_i32_1 = arith.constant 0 : i32
    return %c0_i32, %c0_i32_0 : i32, i32
  }
  func.func @transform_5(%arg0: i32) -> (i32, i32) {
    %c0_i32 = arith.constant 0 : i32
    %c0_i32_0 = arith.constant 0 : i32
    %c0_i32_1 = arith.constant 0 : i32
    return %c0_i32, %c0_i32_0 : i32, i32
  }
  func.func @transform_6(%arg0: i32) -> (i32, i32, i32) {
    %c0_i32 = arith.constant 0 : i32
    %c0_i32_0 = arith.constant 0 : i32
    %c0_i32_1 = arith.constant 0 : i32
    return %arg0, %c0_i32, %c0_i32_0 : i32, i32, i32
  }
}

</mosaic_0001>

<llo_original>
// kernel: tpu_custom_call.1
$region0: #{tpu_custom_call.1}
  #allocation0 [shape = 'u32[]', space=smem, size = 0x4, offset = 0x4, fixed_abs, tag = 'smem constant byte address 0x4 - core index']
  #allocation1 [shape = 'u32[72,128]{1,0:T(1,128)}', space=vmem, size = 0x9000, scoped, tag = 'internal scratch']
  #allocation2 [shape = 'f32[36,256]{1,0:T(8,128)}', space=vmem, size = 0xa000, scoped, tag = 'scratch operand']
  %s0 = inlined_call_operand.hbm [shape: f32[2,8,256], index: 0, kind: input, shape index: {}]
  %s1 = inlined_call_operand.vmem [shape: f32[4,8], index: 1, kind: input, shape index: {}]
  %s2 = inlined_call_operand.vmem [shape: f32[4,1], index: 2, kind: input, shape index: {}]
  %s3 = inlined_call_operand.hbm [shape: f32[9,256], index: 3, kind: input, shape index: {}]
  %s4 = inlined_call_operand.vmem [shape: f32[8,36], index: 4, kind: input, shape index: {}]
  %s5 = inlined_call_operand.vmem [shape: f32[8,1], index: 5, kind: input, shape index: {}]
  %s6 = inlined_call_operand.hbm [shape: f32[2,8,256], index: 6, kind: output, shape index: {}]
  %s7 = sld [smem:[#allocation0]]
  $region65: #{tpu_custom_call.1} parent=0
    _
  %s9 = ssub.s32 1, %s7
  %s10 = scalar_select 0, %s9, %s7
  $region1: #{tpu_custom_call.1} parent=0
    #allocation3 [shape = 'u8[16384]{0}', space=vmem, size = 0x4000, scoped, tag = 'input window, operand 0']
    #allocation4 [shape = 's32[2]{0}', space=sflag, size = 0x8, scoped, tag = 'scoped memory for tpu_custom_call.1']
    #allocation5 [shape = 's32[2]{0}', space=sflag, size = 0x8, scoped, tag = 'scoped memory for tpu_custom_call.1']
    #allocation6 [shape = 'u8[16384]{0}', space=vmem, size = 0x4000, scoped, tag = 'input window, operand 3, single buffered']
    #allocation7 [shape = 's32[1]{0}', space=sflag, size = 0x4, scoped, tag = 'scoped memory for tpu_custom_call.1']
    #allocation8 [shape = 'u8[16384]{0}', space=vmem, size = 0x4000, scoped, tag = 'output window, operand 0']
    %11 = vsyncpa [#allocation4], 0
    %s12 = scalar_lea.sflag [#allocation4], 1
    %13 = vsyncpa %s12, 0
    %14 = vsyncpa [#allocation7], 0
    %15 = vsyncpa [#allocation5], 0
    %s16 = scalar_lea.sflag [#allocation5], 1
    %17 = vsyncpa %s16, 0
    loop: start=0, step=1, limit=4
    $region2: #{tpu_custom_call.1} parent=1 // loop_pre_header
      _
    $region3: #{tpu_custom_call.1} parent=1 // loop_header
      %s19 = sphi 0, %s23
      %p20 = scmp.ge.s32.totalorder %s19, 4
      %s29 = sphi 0, %s31
      %s32 = sphi 0, %s29
      %s33 = sphi 0, %s32
      %s49 = sphi 0, %s33
      %s53 = sphi 0, %s53
      %s55 = sphi 0, %s53
      %s56 = sphi 0, %s55
      %s70 = sphi 0, %s56
      %s74 = sphi 0, %s74
      %s76 = sphi 0, %s74
      %s77 = sphi 0, %s76
      %s91 = sphi 0, %s77
      %s95 = sphi 0, %s95
      %s97 = sphi 0, %s95
      %s98 = sphi 0, %s97
      %s112 = sphi 0, %s98
      %s116 = sphi 0, %s116
      %s118 = sphi 0, %s116
      %s119 = sphi 0, %s118
      %s133 = sphi 0, %s119
      %s137 = sphi 0, %s137
      %s139 = sphi 0, %s137
      %s140 = sphi 0, %s139
      %s154 = sphi 0, %s140
      %s160 = sphi 0, %s162
      %s163 = sphi 0, %s160
      %s164 = sphi 0, %s163
      %s180 = sphi 0, %s164
    $region4: #{tpu_custom_call.1} parent=1 // loop_header_branch
      %22 = sbr.rel (%p20) target = $region8
    $region5: #{tpu_custom_call.1} parent=1 // loop_body
      %s24 = ssub.s32 %s19, 1
      %s25 = ssub.s32 %s19, 2
      %s26 = sadd.s32 %s19, 1
      %s27 = ssub.s32 %s19, %s26
      %p28 = scmp.eq.s32.totalorder %s27, 0
      %s30 = sadd.s32 %s29, 1
      %s31 = scalar_select %p28, %s29, %s30
      %p34 = pneg %p28
      %p35 = scmp.eq.s32.totalorder %s19, 1
      %p36 = por %p34, %p35
      %p37 = scmp.ne.s32.totalorder %s29, %s32
      %p38 = scmp.eq.s32.totalorder %s19, 0
      %p39 = por %p37, %p38
      %p40 = scmp.ne.s32.totalorder %s29, %s32
      %p41 = scmp.eq.s32.totalorder %s24, 1
      %p42 = por %p40, %p41
      %p43 = scmp.ne.s32.totalorder %s32, %s33
      %p44 = scmp.eq.s32.totalorder %s24, 0
      %p45 = por %p43, %p44
      %p46 = scmp.ne.s32.totalorder %s32, %s33
      %p47 = scmp.eq.s32.totalorder %s25, 1
      %p48 = por %p46, %p47
      %p50 = scmp.ne.s32.totalorder %s33, %s49
      %p51 = scmp.eq.s32.totalorder %s25, 0
      %p52 = por %p50, %p51
      %s54 = sadd.s32 %s53, 1
      %p57 = scmp.eq.s32.totalorder %s19, 1
      %p58 = scmp.ne.s32.totalorder %s53, %s55
      %p59 = scmp.eq.s32.totalorder %s19, 0
      %p60 = por %p58, %p59
      %p61 = scmp.ne.s32.totalorder %s53, %s55
      %p62 = scmp.eq.s32.totalorder %s24, 1
      %p63 = por %p61, %p62
      %p64 = scmp.ne.s32.totalorder %s55, %s56
      %p65 = scmp.eq.s32.totalorder %s24, 0
      %p66 = por %p64, %p65
      %p67 = scmp.ne.s32.totalorder %s55, %s56
      %p68 = scmp.eq.s32.totalorder %s25, 1
      %p69 = por %p67, %p68
      %p71 = scmp.ne.s32.totalorder %s56, %s70
      %p72 = scmp.eq.s32.totalorder %s25, 0
      %p73 = por %p71, %p72
      %s75 = sadd.s32 %s74, 1
      %p78 = scmp.eq.s32.totalorder %s19, 1
      %p79 = scmp.ne.s32.totalorder %s74, %s76
      %p80 = scmp.eq.s32.totalorder %s19, 0
      %p81 = por %p79, %p80
      %p82 = scmp.ne.s32.totalorder %s74, %s76
      %p83 = scmp.eq.s32.totalorder %s24, 1
      %p84 = por %p82, %p83
      %p85 = scmp.ne.s32.totalorder %s76, %s77
      %p86 = scmp.eq.s32.totalorder %s24, 0
      %p87 = por %p85, %p86
      %p88 = scmp.ne.s32.totalorder %s76, %s77
      %p89 = scmp.eq.s32.totalorder %s25, 1
      %p90 = por %p88, %p89
      %p92 = scmp.ne.s32.totalorder %s77, %s91
      %p93 = scmp.eq.s32.totalorder %s25, 0
      %p94 = por %p92, %p93
      %s96 = sadd.s32 %s95, 1
      %p99 = scmp.eq.s32.totalorder %s19, 1
      %p100 = scmp.ne.s32.totalorder %s95, %s97
      %p101 = scmp.eq.s32.totalorder %s19, 0
      %p102 = por %p100, %p101
      %p103 = scmp.ne.s32.totalorder %s95, %s97
      %p104 = scmp.eq.s32.totalorder %s24, 1
      %p105 = por %p103, %p104
      %p106 = scmp.ne.s32.totalorder %s97, %s98
      %p107 = scmp.eq.s32.totalorder %s24, 0
      %p108 = por %p106, %p107
      %p109 = scmp.ne.s32.totalorder %s97, %s98
      %p110 = scmp.eq.s32.totalorder %s25, 1
      %p111 = por %p109, %p110
      %p113 = scmp.ne.s32.totalorder %s98, %s112
      %p114 = scmp.eq.s32.totalorder %s25, 0
      %p115 = por %p113, %p114
      %s117 = sadd.s32 %s116, 1
      %p120 = scmp.eq.s32.totalorder %s19, 1
      %p121 = scmp.ne.s32.totalorder %s116, %s118
      %p122 = scmp.eq.s32.totalorder %s19, 0
      %p123 = por %p121, %p122
      %p124 = scmp.ne.s32.totalorder %s116, %s118
      %p125 = scmp.eq.s32.totalorder %s24, 1
      %p126 = por %p124, %p125
      %p127 = scmp.ne.s32.totalorder %s118, %s119
      %p128 = scmp.eq.s32.totalorder %s24, 0
      %p129 = por %p127, %p128
      %p130 = scmp.ne.s32.totalorder %s118, %s119
      %p131 = scmp.eq.s32.totalorder %s25, 1
      %p132 = por %p130, %p131
      %p134 = scmp.ne.s32.totalorder %s119, %s133
      %p135 = scmp.eq.s32.totalorder %s25, 0
      %p136 = por %p134, %p135
      %s138 = sadd.s32 %s137, 1
      %p141 = scmp.eq.s32.totalorder %s19, 1
      %p142 = scmp.ne.s32.totalorder %s137, %s139
      %p143 = scmp.eq.s32.totalorder %s19, 0
      %p144 = por %p142, %p143
      %p145 = scmp.ne.s32.totalorder %s137, %s139
      %p146 = scmp.eq.s32.totalorder %s24, 1
      %p147 = por %p145, %p146
      %p148 = scmp.ne.s32.totalorder %s139, %s140
      %p149 = scmp.eq.s32.totalorder %s24, 0
      %p150 = por %p148, %p149
      %p151 = scmp.ne.s32.totalorder %s139, %s140
      %p152 = scmp.eq.s32.totalorder %s25, 1
      %p153 = por %p151, %p152
      %p155 = scmp.ne.s32.totalorder %s140, %s154
      %p156 = scmp.eq.s32.totalorder %s25, 0
      %p157 = por %p155, %p156
      %s158 = ssub.s32 %s19, %s26
      %p159 = scmp.eq.s32.totalorder %s158, 0
      %s161 = sadd.s32 %s160, 1
      %s162 = scalar_select %p159, %s160, %s161
      %p165 = pneg %p159
      %p166 = scmp.eq.s32.totalorder %s19, 1
      %p167 = por %p165, %p166
      %p168 = scmp.ne.s32.totalorder %s160, %s163
      %p169 = scmp.eq.s32.totalorder %s19, 0
      %p170 = por %p168, %p169
      %p171 = scmp.ne.s32.totalorder %s160, %s163
      %p172 = scmp.eq.s32.totalorder %s24, 1
      %p173 = por %p171, %p172
      %p174 = scmp.ne.s32.totalorder %s163, %s164
      %p175 = scmp.eq.s32.totalorder %s24, 0
      %p176 = por %p174, %p175
      %p177 = scmp.ne.s32.totalorder %s163, %s164
      %p178 = scmp.eq.s32.totalorder %s25, 1
      %p179 = por %p177, %p178
      %p181 = scmp.ne.s32.totalorder %s164, %s180
      %p182 = scmp.eq.s32.totalorder %s25, 0
      %p183 = por %p181, %p182
      %p184 = scmp.le.s32.totalorder 1, %s19
      %p185 = scmp.lt.s32.totalorder %s19, 3
      %p186 = pnand %p184, %p185
      %p187 = pneg %p186
      // Predicated region
      $region9: #{tpu_custom_call.1} parent=5 // pred_check
        _
      $region10: #{tpu_custom_call.1} parent=5 // pred_check_branch
        %189 = sbr.rel (%p186) target = $region12
      $region11: #{tpu_custom_call.1} parent=5 // pred_region
        %s190 = ssub.s32 %s19, 1
        // Predicated region
        $region13: #{tpu_custom_call.1} parent=11 // pred_check
          %p191 = pneg %p66
        $region14: #{tpu_custom_call.1} parent=11 // pred_check_branch
          %193 = sbr.rel (%p191) target = $region16
        $region15: #{tpu_custom_call.1} parent=11 // pred_region
          _
        $region16: #{tpu_custom_call.1} parent=11 // pred_fallthru
          _
        // Predicated region
        $region17: #{tpu_custom_call.1} parent=11 // pred_check
          %p194 = pneg %p87
        $region18: #{tpu_custom_call.1} parent=11 // pred_check_branch
          %196 = sbr.rel (%p194) target = $region20
        $region19: #{tpu_custom_call.1} parent=11 // pred_region
          _
        $region20: #{tpu_custom_call.1} parent=11 // pred_fallthru
          _
        // Predicated region
        $region21: #{tpu_custom_call.1} parent=11 // pred_check
          %p197 = pneg %p108
        $region22: #{tpu_custom_call.1} parent=11 // pred_check_branch
          %199 = sbr.rel (%p197) target = $region24
        $region23: #{tpu_custom_call.1} parent=11 // pred_region
          %201 = vsyncadd [#allocation7], 0
          %s202 = sshll.u32 %s3, 4
          %s203 = int_to_ptr.hbm [resolvable:$true] %s202
          %s204 = sshll.u32 [#allocation6], 4
          %s205 = int_to_ptr.vmem [resolvable:$true] %s204
          %210 = dma.hbm_to_vmem [thread:$0]  %s203, 512, %s205, [#allocation7], 256, 256, 16
        $region24: #{tpu_custom_call.1} parent=11 // pred_fallthru
          _
        // Predicated region
        $region25: #{tpu_custom_call.1} parent=11 // pred_check
          %p211 = pneg %p129
        $region26: #{tpu_custom_call.1} parent=11 // pred_check_branch
          %213 = sbr.rel (%p211) target = $region28
        $region27: #{tpu_custom_call.1} parent=11 // pred_region
          _
        $region28: #{tpu_custom_call.1} parent=11 // pred_fallthru
          _
        // Predicated region
        $region29: #{tpu_custom_call.1} parent=11 // pred_check
          %p214 = pneg %p150
        $region30: #{tpu_custom_call.1} parent=11 // pred_check_branch
          %216 = sbr.rel (%p214) target = $region32
        $region31: #{tpu_custom_call.1} parent=11 // pred_region
          _
        $region32: #{tpu_custom_call.1} parent=11 // pred_fallthru
          _
      $region12: #{tpu_custom_call.1} parent=5 // pred_fallthru
        _
      %p217 = scmp.lt.s32.totalorder %s19, 2
      // Predicated region
      $region33: #{tpu_custom_call.1} parent=5 // pred_check
        %p218 = pneg %p217
      $region34: #{tpu_custom_call.1} parent=5 // pred_check_branch
        %220 = sbr.rel (%p218) target = $region36
      $region35: #{tpu_custom_call.1} parent=5 // pred_region
        // Predicated region
        $region37: #{tpu_custom_call.1} parent=35 // pred_check
          %p221 = pneg %p39
        $region38: #{tpu_custom_call.1} parent=35 // pred_check_branch
          %223 = sbr.rel (%p221) target = $region40
        $region39: #{tpu_custom_call.1} parent=35 // pred_region
          %s224 = sand.u32 %s29, 1
          %s225 = scalar_lea.sflag [#allocation4], %s224
          %s226 = sand.u32 %s29, 1
          %s227 = smul.addr %s226, 16
          %s228 = scalar_lea.vmem [#allocation3], %s227
          %230 = vsyncadd %s225, 0
          %s231 = smul.addr %s19, 2
          %s232 = smul.addr %s231, 8
          %s233 = scalar_lea.hbm %s0, %s232
          %s235 = sshll.u32 %s233, 4
          %s236 = int_to_ptr.hbm [resolvable:$true] %s235
          %s237 = sshll.u32 %s228, 4
          %s238 = int_to_ptr.vmem [resolvable:$true] %s237
          %240 = dma.hbm_to_vmem [thread:$0]  %s236, 256, %s238, %s225
        $region40: #{tpu_custom_call.1} parent=35 // pred_fallthru
          _
      $region36: #{tpu_custom_call.1} parent=5 // pred_fallthru
        _
      %p241 = scmp.le.s32.totalorder 1, %s19
      %p242 = scmp.lt.s32.totalorder %s19, 3
      %p243 = pnand %p241, %p242
      %p244 = pneg %p243
      // Predicated region
      $region41: #{tpu_custom_call.1} parent=5 // pred_check
        _
      $region42: #{tpu_custom_call.1} parent=5 // pred_check_branch
        %246 = sbr.rel (%p243) target = $region44
      $region43: #{tpu_custom_call.1} parent=5 // pred_region
        %s247 = ssub.s32 %s19, 1
        %s248 = sand.u32 %s32, 1
        %s249 = scalar_lea.sflag [#allocation4], %s248
        %s250 = sand.u32 %s32, 1
        %s251 = smul.addr %s250, 16
        %s252 = scalar_lea.vmem [#allocation3], %s251
        // Predicated region
        $region45: #{tpu_custom_call.1} parent=43 // pred_check
          %p253 = pneg %p45
        $region46: #{tpu_custom_call.1} parent=43 // pred_check_branch
          %255 = sbr.rel (%p253) target = $region48
        $region47: #{tpu_custom_call.1} parent=43 // pred_region
          %257 = dma.done %s249, 256
        $region48: #{tpu_custom_call.1} parent=43 // pred_fallthru
          _
        // Predicated region
        $region49: #{tpu_custom_call.1} parent=43 // pred_check
          %p258 = pneg %p108
        $region50: #{tpu_custom_call.1} parent=43 // pred_check_branch
          %260 = sbr.rel (%p258) target = $region52
        $region51: #{tpu_custom_call.1} parent=43 // pred_region
          %262 = dma.done [#allocation7], 512
        $region52: #{tpu_custom_call.1} parent=43 // pred_fallthru
          _
        %s263 = sand.u32 %s32, 1
        %s264 = scalar_lea.sflag [#allocation4], %s263
        %s265 = sand.u32 %s32, 1
        %s266 = smul.addr %s265, 16
        %s267 = scalar_lea.vmem [#allocation3], %s266
        %p268 = pneg %p45
        %p269 = pneg %p42
        %p270 = pneg %p66
        %p271 = pneg %p63
        %p272 = pneg %p87
        %p273 = pneg %p84
        %p274 = pneg %p108
        %p275 = pneg %p105
        %p276 = pneg %p129
        %p277 = pneg %p126
        %p278 = pneg %p150
        %p279 = pneg %p147
        %p280 = pneg %p176
        %p281 = pneg %p173
        %s282 = sand.u32 %s163, 1
        %s283 = scalar_lea.sflag [#allocation5], %s282
        %s284 = sand.u32 %s163, 1
        %s285 = smul.addr %s284, 16
        %s286 = scalar_lea.vmem [#allocation8], %s285
        %v287 = vld [vmem:[%s252] sm:$0xff]
        %v288 = vld [vmem:[%s252 + $0x8] sm:$0xff]
        %v289 = vld [vmem:[%s1] sm:$0xf]
        %v290 = vld [vmem:[%s2] sm:$0xf]
        %292 = vset.pattern.permute.xlu0 0
        %293 = vperm.xlu0 %292, %v290
        %v294 = vpop.permute.xlu0 %293
        %vm296 = vcmask 64512
        %v298 = vsel %vm296, %v289, 0
        %300 = vmatpush.msra.mxu0 0.0
        %301 = vmatpush.msra.mxu0 0.0
        %302 = vmatpush.msra.mxu0 0.0
        %303 = vmatpush.msra.mxu0 0.0
        %304 = vmatpush.msra.mxu0 0.0
        %305 = vmatpush.msra.mxu0 0.0
        %306 = vmatpush.msra.mxu0 0.0
        %307 = vmatpush.msra.mxu0 0.0
        %308 = vmatpush.msra.mxu0 0.0
        %309 = vmatpush.msra.mxu0 0.0
        %310 = vmatpush.msra.mxu0 0.0
        %311 = vmatpush.msra.mxu0 0.0
        %312 = vmatpush.msra.mxu0 0.0
        %313 = vmatpush.msra.mxu0 0.0
        %314 = vmatpush.msra.mxu0 0.0
        %315 = vmatpush.msra.mxu0 %v287
        %316 = vmatmul.f32.gmra.mxu0 %v298
        %v317 = vpop.f32.mrf.mxu0
        %v318 = vadd.f32 %v294, %v317
        %319 = vdwg.mxu0
        %320 = vmatpush.msra.mxu0 0.0
        %321 = vmatpush.msra.mxu0 0.0
        %322 = vmatpush.msra.mxu0 0.0
        %323 = vmatpush.msra.mxu0 0.0
        %324 = vmatpush.msra.mxu0 0.0
        %325 = vmatpush.msra.mxu0 0.0
        %326 = vmatpush.msra.mxu0 0.0
        %327 = vmatpush.msra.mxu0 0.0
        %328 = vmatpush.msra.mxu0 0.0
        %329 = vmatpush.msra.mxu0 0.0
        %330 = vmatpush.msra.mxu0 0.0
        %331 = vmatpush.msra.mxu0 0.0
        %332 = vmatpush.msra.mxu0 0.0
        %333 = vmatpush.msra.mxu0 0.0
        %334 = vmatpush.msra.mxu0 0.0
        %335 = vmatpush.msra.mxu0 %v288
        %336 = vmatmul.f32.gmra.mxu0 %v298
        %v337 = vpop.f32.mrf.mxu0
        %v338 = vadd.f32 %v294, %v337
        %339 = vdwg.mxu0
        %vm340 = vcmp.gt.f32.partialorder %v318, 0.0
        %vm341 = vcmp.gt.f32.partialorder %v338, 0.0
        %v342 = vmul.f32 %v318, 0.01
        %v343 = vmul.f32 %v338, 0.01
        %v344 = vsel %vm340, %v318, %v342
        %v345 = vsel %vm341, %v338, %v343
        %346 = vrot.lane.b32.xlu0 %v344, 17
        %v347 = vpop.permute.xlu0 %346
        %348 = vrot.lane.b32.xlu0 %v345, 17
        %v349 = vpop.permute.xlu0 %348
        %v350 = vlaneseq
        %v351 = vand.u32 %v350, 127
        %vm352 = vcmp.lt.s32.totalorder %v351, 17
        %v353 = vsel %vm352, %v347, %v349
        %v354 = vsel %vm352, %v349, %v347
        %v355 = vld [vmem:[#allocation6] ss:$8 sm:$0x3]
        %v357 = vperm.slane %v355, 0
        %v358 = vperm.slane %v355, 1
        %v361 = vmul.f32 %v354, %v357
        %v362 = vmul.f32 %v353, %v358
        %363 = vst [vmem:[#allocation2] sm:$0xf] %v361
        %364 = vst [vmem:[#allocation2 + $0x8] sm:$0xf] %v362
        %365 = vrot.lane.b32.xlu0 %v344, 16
        %v366 = vpop.permute.xlu0 %365
        %367 = vrot.lane.b32.xlu0 %v345, 16
        %v368 = vpop.permute.xlu0 %367
        %vm369 = vcmp.lt.s32.totalorder %v351, 16
        %v370 = vsel %vm369, %v366, %v368
        %v371 = vsel %vm369, %v368, %v366
        %s372 = scalar_lea.vmem [#allocation6], 1
        %v373 = vld [vmem:[%s372] ss:$8 sm:$0x3]
        %v375 = vperm.slane %v373, 0
        %v376 = vperm.slane %v373, 1
        %v379 = vmul.f32 %v371, %v375
        %v380 = vmul.f32 %v370, %v376
        %v383 = vrot.slane %v379, 4
        %v384 = vrot.slane %v380, 4
        %387 = vst [vmem:[#allocation2] sm:$0xf0] %v383
        %388 = vst [vmem:[#allocation2 + $0x8] sm:$0xf0] %v384
        %389 = vrot.lane.b32.xlu0 %v344, 15
        %v390 = vpop.permute.xlu0 %389
        %391 = vrot.lane.b32.xlu0 %v345, 15
        %v392 = vpop.permute.xlu0 %391
        %vm393 = vcmp.lt.s32.totalorder %v351, 15
        %v394 = vsel %vm393, %v390, %v392
        %v395 = vsel %vm393, %v392, %v390
        %s396 = scalar_lea.vmem [#allocation6], 2
        %v397 = vld [vmem:[%s396] ss:$8 sm:$0x3]
        %v399 = vperm.slane %v397, 0
        %v400 = vperm.slane %v397, 1
        %v403 = vmul.f32 %v395, %v399
        %v404 = vmul.f32 %v394, %v400
        %405 = vst [vmem:[#allocation2 + $0x10] sm:$0xf] %v403
        %406 = vst [vmem:[#allocation2 + $0x18] sm:$0xf] %v404
        %407 = vrot.lane.b32.xlu0 %v344, 1
        %v408 = vpop.permute.xlu0 %407
        %409 = vrot.lane.b32.xlu0 %v345, 1
        %v410 = vpop.permute.xlu0 %409
        %vm411 = vcmp.lt.s32.totalorder %v351, 1
        %v412 = vsel %vm411, %v408, %v410
        %v413 = vsel %vm411, %v410, %v408
        %s414 = scalar_lea.vmem [#allocation6], 3
        %v415 = vld [vmem:[%s414] ss:$8 sm:$0x3]
        %v417 = vperm.slane %v415, 0
        %v418 = vperm.slane %v415, 1
        %v421 = vmul.f32 %v413, %v417
        %v422 = vmul.f32 %v412, %v418
        %v425 = vrot.slane %v421, 4
        %v426 = vrot.slane %v422, 4
        %429 = vst [vmem:[#allocation2 + $0x10] sm:$0xf0] %v425
        %430 = vst [vmem:[#allocation2 + $0x18] sm:$0xf0] %v426
        %s431 = scalar_lea.vmem [#allocation6], 4
        %v432 = vld [vmem:[%s431] ss:$8 sm:$0x3]
        %v434 = vperm.slane %v432, 0
        %v435 = vperm.slane %v432, 1
        %v438 = vmul.f32 %v344, %v434
        %v439 = vmul.f32 %v345, %v435
        %440 = vst [vmem:[#allocation2 + $0x20] sm:$0xf] %v438
        %441 = vst [vmem:[#allocation2 + $0x28] sm:$0xf] %v439
        %442 = vrot.lane.b32.xlu0 %v344, 127
        %v443 = vpop.permute.xlu0 %442
        %444 = vrot.lane.b32.xlu0 %v345, 127
        %v445 = vpop.permute.xlu0 %444
        %vm446 = vcmp.lt.s32.totalorder %v351, 127
        %v447 = vsel %vm446, %v443, %v445
        %v448 = vsel %vm446, %v445, %v443
        %s449 = scalar_lea.vmem [#allocation6], 5
        %v450 = vld [vmem:[%s449] ss:$8 sm:$0x3]
        %v452 = vperm.slane %v450, 0
        %v453 = vperm.slane %v450, 1
        %v456 = vmul.f32 %v447, %v452
        %v457 = vmul.f32 %v448, %v453
        %v460 = vrot.slane %v456, 4
        %v461 = vrot.slane %v457, 4
        %464 = vst [vmem:[#allocation2 + $0x20] sm:$0xf0] %v460
        %465 = vst [vmem:[#allocation2 + $0x28] sm:$0xf0] %v461
        %466 = vrot.lane.b32.xlu0 %v344, 113
        %v467 = vpop.permute.xlu0 %466
        %468 = vrot.lane.b32.xlu0 %v345, 113
        %v469 = vpop.permute.xlu0 %468
        %vm470 = vcmp.lt.s32.totalorder %v351, 113
        %v471 = vsel %vm470, %v467, %v469
        %v472 = vsel %vm470, %v469, %v467
        %s473 = scalar_lea.vmem [#allocation6], 6
        %v474 = vld [vmem:[%s473] ss:$8 sm:$0x3]
        %v476 = vperm.slane %v474, 0
        %v477 = vperm.slane %v474, 1
        %v480 = vmul.f32 %v471, %v476
        %v481 = vmul.f32 %v472, %v477
        %482 = vst [vmem:[#allocation2 + $0x30] sm:$0xf] %v480
        %483 = vst [vmem:[#allocation2 + $0x38] sm:$0xf] %v481
        %484 = vrot.lane.b32.xlu0 %v344, 112
        %v485 = vpop.permute.xlu0 %484
        %486 = vrot.lane.b32.xlu0 %v345, 112
        %v487 = vpop.permute.xlu0 %486
        %vm488 = vcmp.lt.s32.totalorder %v351, 112
        %v489 = vsel %vm488, %v485, %v487
        %v490 = vsel %vm488, %v487, %v485
        %s491 = scalar_lea.vmem [#allocation6], 7
        %v492 = vld [vmem:[%s491] ss:$8 sm:$0x3]
        %v494 = vperm.slane %v492, 0
        %v495 = vperm.slane %v492, 1
        %v498 = vmul.f32 %v489, %v494
        %v499 = vmul.f32 %v490, %v495
        %v502 = vrot.slane %v498, 4
        %v503 = vrot.slane %v499, 4
        %506 = vst [vmem:[#allocation2 + $0x30] sm:$0xf0] %v502
        %507 = vst [vmem:[#allocation2 + $0x38] sm:$0xf0] %v503
        %508 = vrot.lane.b32.xlu0 %v344, 111
        %v509 = vpop.permute.xlu0 %508
        %510 = vrot.lane.b32.xlu0 %v345, 111
        %v511 = vpop.permute.xlu0 %510
        %vm512 = vcmp.lt.s32.totalorder %v351, 111
        %v513 = vsel %vm512, %v509, %v511
        %v514 = vsel %vm512, %v511, %v509
        %s515 = scalar_lea.vmem [#allocation6], 16
        %v516 = vld [vmem:[%s515] ss:$8 sm:$0x3]
        %v518 = vperm.slane %v516, 0
        %v519 = vperm.slane %v516, 1
        %v522 = vmul.f32 %v513, %v518
        %v523 = vmul.f32 %v514, %v519
        %524 = vst [vmem:[#allocation2 + $0x40] sm:$0xf] %v522
        %525 = vst [vmem:[#allocation2 + $0x48] sm:$0xf] %v523
        %v526 = vld [vmem:[%s4] sm:$0xff]
        %v527 = vld [vmem:[#allocation2] sm:$0xff]
        %v528 = vld [vmem:[#allocation2 + $0x8] sm:$0xff]
        %v529 = vld [vmem:[#allocation2 + $0x10] sm:$0xff]
        %v530 = vld [vmem:[#allocation2 + $0x18] sm:$0xff]
        %v531 = vld [vmem:[#allocation2 + $0x20] sm:$0xff]
        %v532 = vld [vmem:[#allocation2 + $0x28] sm:$0xff]
        %v533 = vld [vmem:[#allocation2 + $0x30] sm:$0xff]
        %v534 = vld [vmem:[#allocation2 + $0x38] sm:$0xff]
        %v535 = vld [vmem:[#allocation2 + $0x40] sm:$0xf]
        %v536 = vld [vmem:[#allocation2 + $0x48] sm:$0xf]
        %v537 = vld [vmem:[%s5] sm:$0xff]
        %539 = vset.pattern.permute.xlu0 0
        %540 = vperm.xlu0 %539, %v537
        %v541 = vpop.permute.xlu0 %540
        %vm543 = vcmask 293888
        %v545 = vsel %vm543, %v526, 0
        %vm547 = vcmask 1043456
        %v549 = vsel %vm547, %v535, 0
        %v552 = vsel %vm547, %v536, 0
        %554 = vmatpush.msra.mxu0 0.0
        %555 = vmatpush.msra.mxu0 0.0
        %556 = vmatpush.msra.mxu0 0.0
        %557 = vmatpush.msra.mxu0 0.0
        %558 = vmatpush.msra.mxu0 0.0
        %559 = vmatpush.msra.mxu0 0.0
        %560 = vmatpush.msra.mxu0 0.0
        %561 = vmatpush.msra.mxu0 0.0
        %562 = vmatpush.msra.mxu0 0.0
        %563 = vmatpush.msra.mxu0 0.0
        %564 = vmatpush.msra.mxu0 0.0
        %565 = vmatpush.msra.mxu0 %v549
        %566 = vmatpush.msra.mxu0 %v533
        %567 = vmatpush.msra.mxu0 %v531
        %568 = vmatpush.msra.mxu0 %v529
        %569 = vmatpush.msra.mxu0 %v527
        %570 = vmatmul.f32.gmra.mxu0 %v545
        %v571 = vpop.f32.mrf.mxu0
        %v572 = vadd.f32 %v541, %v571
        %573 = vdwg.mxu0
        %574 = vmatpush.msra.mxu0 0.0
        %575 = vmatpush.msra.mxu0 0.0
        %576 = vmatpush.msra.mxu0 0.0
        %577 = vmatpush.msra.mxu0 0.0
        %578 = vmatpush.msra.mxu0 0.0
        %579 = vmatpush.msra.mxu0 0.0
        %580 = vmatpush.msra.mxu0 0.0
        %581 = vmatpush.msra.mxu0 0.0
        %582 = vmatpush.msra.mxu0 0.0
        %583 = vmatpush.msra.mxu0 0.0
        %584 = vmatpush.msra.mxu0 0.0
        %585 = vmatpush.msra.mxu0 %v552
        %586 = vmatpush.msra.mxu0 %v534
        %587 = vmatpush.msra.mxu0 %v532
        %588 = vmatpush.msra.mxu0 %v530
        %589 = vmatpush.msra.mxu0 %v528
        %590 = vmatmul.f32.gmra.mxu0 %v545
        %v591 = vpop.f32.mrf.mxu0
        %v592 = vadd.f32 %v541, %v591
        %593 = vdwg.mxu0
        %vm594 = vcmp.gt.f32.partialorder %v572, 0.0
        %vm595 = vcmp.gt.f32.partialorder %v592, 0.0
        %v596 = vmul.f32 %v572, 0.01
        %v597 = vmul.f32 %v592, 0.01
        %v598 = vsel %vm594, %v572, %v596
        %v599 = vsel %vm595, %v592, %v597
        %v600 = vadd.f32 %v598, %v287
        %v601 = vadd.f32 %v599, %v288
        %602 = vst [vmem:[%s286] sm:$0xff] %v600
        %603 = vst [vmem:[%s286 + $0x8] sm:$0xff] %v601
        %s604 = sand.u32 %s163, 1
        %s605 = scalar_lea.sflag [#allocation5], %s604
        %s606 = sand.u32 %s163, 1
        %s607 = smul.addr %s606, 16
        %s608 = scalar_lea.vmem [#allocation8], %s607
        // Predicated region
        $region53: #{tpu_custom_call.1} parent=43 // pred_check
          %p609 = pneg %p173
        $region54: #{tpu_custom_call.1} parent=43 // pred_check_branch
          %611 = sbr.rel (%p609) target = $region56
        $region55: #{tpu_custom_call.1} parent=43 // pred_region
          %613 = vsyncadd %s605, 0
          %s614 = smul.addr %s24, 2
          %s615 = smul.addr %s614, 8
          %s616 = scalar_lea.hbm %s6, %s615
          %s618 = sshll.u32 %s608, 4
          %s619 = int_to_ptr.vmem [resolvable:$true] %s618
          %s620 = sshll.u32 %s616, 4
          %s621 = int_to_ptr.hbm [resolvable:$true] %s620
          %623 = dma.vmem_to_hbm [thread:$0]  %s619, 256, %s621, %s605
        $region56: #{tpu_custom_call.1} parent=43 // pred_fallthru
          _
      $region44: #{tpu_custom_call.1} parent=5 // pred_fallthru
        _
      %p624 = scmp.le.s32.totalorder 2, %s19
      // Predicated region
      $region57: #{tpu_custom_call.1} parent=5 // pred_check
        %p625 = pneg %p624
      $region58: #{tpu_custom_call.1} parent=5 // pred_check_branch
        %627 = sbr.rel (%p625) target = $region60
      $region59: #{tpu_custom_call.1} parent=5 // pred_region
        %s628 = ssub.s32 %s19, 2
        // Predicated region
        $region61: #{tpu_custom_call.1} parent=59 // pred_check
          %p629 = pneg %p179
        $region62: #{tpu_custom_call.1} parent=59 // pred_check_branch
          %631 = sbr.rel (%p629) target = $region64
        $region63: #{tpu_custom_call.1} parent=59 // pred_region
          %s632 = sand.u32 %s164, 1
          %s633 = scalar_lea.sflag [#allocation5], %s632
          %s634 = sand.u32 %s164, 1
          %s635 = smul.addr %s634, 16
          %s636 = scalar_lea.vmem [#allocation8], %s635
          %638 = dma.done %s633, 256
        $region64: #{tpu_custom_call.1} parent=59 // pred_fallthru
          _
      $region60: #{tpu_custom_call.1} parent=5 // pred_fallthru
        _
    $region6: #{tpu_custom_call.1} parent=1 // loop_footer
      %s23 = sadd.s32 1, %s19
    $region7: #{tpu_custom_call.1} parent=1 // loop_footer_branch
      %18 = sbr.rel target = $region3
    $region8: #{tpu_custom_call.1} parent=1 // loop_exit
      _
    %639 = vsyncpa [#allocation4], 1
    %s640 = scalar_lea.sflag [#allocation4], 1
    %641 = vsyncpa %s640, 1
    %642 = vsyncpa [#allocation7], 1
    %643 = vsyncpa [#allocation5], 1
    %s644 = scalar_lea.sflag [#allocation5], 1
    %645 = vsyncpa %s644, 1

</llo_original>
